<compile_context>
chip_gen: v6e
topology: v6e:2x2x1
jax: 0.10.0
libtpu: 0.0.40
codegen_flags: <defaults>
</compile_context>

<pallas_src>
import jax
import jax.numpy as jnp
from jax import lax
from jax.experimental import pallas as pl
from jax.experimental.pallas import tpu as pltpu


# ----------------------------------------------------------------------------
# Kernel 1: weighted per-row cross-entropy + softmax probabilities.
#   grid = (N/tm,), fully parallel; outputs per-row weighted CE and probs.
# ----------------------------------------------------------------------------
def _ce_softmax_kernel(logits_ref, labels_ref, w_ref, wce_ref, probs_ref):
    logits = logits_ref[...].astype(jnp.float32)               # (tm, C)
    tm, c = logits.shape

    m = jnp.max(logits, axis=1, keepdims=True)
    z = logits - m
    ez = jnp.exp(z)
    denom = jnp.sum(ez, axis=1, keepdims=True)
    probs_ref[...] = ez * pl.reciprocal(denom)                  # EUP reciprocal
    logp = z - jnp.log(denom)                                   # log-softmax

    col = lax.broadcasted_iota(jnp.int32, (tm, c), 1)
    onehot = (col == labels_ref[...]).astype(jnp.float32)       # labels: (tm,1)
    ce_rows = -jnp.sum(logp * onehot, axis=1, keepdims=True)    # (tm, 1)
    wce_ref[...] = ce_rows * w_ref[...]                         # weighted CE/row


# ----------------------------------------------------------------------------
# Kernel 2: per-(pseudo-)class distance-correlation partial sums.
#   grid = (C+1, N/tn); class axis "parallel", column-tile axis "arbitrary".
#   Block = (tn tile rows) x (full N lanes):
#       amat[j, k] = |x_tile[j] - x[k]|          (tn, N)
#       bmat[j, k] = |e_tile[j] - e[k]|
#   Lane-dense accumulators over the tile axis (w_j = normed weight of row j):
#       asum[k]  += sum_j w_j a_jk      ->  N * weighted row mean (abar)
#       aasum[k] += sum_j w_j a_jk^2
#       absum[k] += sum_j w_j a_jk b_jk
# ----------------------------------------------------------------------------
def _disco_stats_kernel(xrow_ref, xcol_ref, erow_ref, ecol_ref, wcol_ref,
                        asum_ref, aasum_ref, absum_ref):
    t = pl.program_id(1)

    x_row = xrow_ref[0]          # (1, N)   this (pseudo-)class, lane-dense
    e_row = erow_ref[...]        # (1, N)   event, lane-dense
    x_tc = xcol_ref[0]           # (tn, 1)  same variable, current row tile
    e_tc = ecol_ref[...]         # (tn, 1)
    w_tc = wcol_ref[...]         # (tn, 1)  normed weights, current row tile

    amat = jnp.abs(x_tc - x_row)                          # (tn, N)
    bmat = jnp.abs(e_tc - e_row)                          # (tn, N)
    wa = w_tc * amat                                      # (tn, N)

    # Sublane (axis 0) reductions -> lane-dense (1, N) partials.
    asum = jnp.sum(wa, axis=0, keepdims=True)             # (1, N)
    aasum = jnp.sum(wa * amat, axis=0, keepdims=True)     # (1, N)
    absum = jnp.sum(wa * bmat, axis=0, keepdims=True)     # (1, N)

    @pl.when(t == 0)
    def _():
        asum_ref[...] = jnp.zeros_like(asum_ref)
        aasum_ref[...] = jnp.zeros_like(aasum_ref)
        absum_ref[...] = jnp.zeros_like(absum_ref)

    asum_ref[...] += asum[None]                           # (1, 1, N)
    aasum_ref[...] += aasum[None]
    absum_ref[...] += absum[None]


# ----------------------------------------------------------------------------
# Tiling / VMEM helpers (generation-aware).
# ----------------------------------------------------------------------------
def _vmem_capacity_bytes():
    cap = 64 * 2 ** 20                     # conservative default (v7x per-TC)
    try:
        info = pltpu.get_tpu_info()
        c = getattr(info, "vmem_capacity_bytes", None)
        if c:
            cap = int(c)
    except Exception:
        pass
    return int(min(max(cap, 64 * 2 ** 20), 256 * 2 ** 20))


def _pick_row_tile(n_pad):
    for tm in (1024, 512, 256, 128):
        if n_pad >= tm and n_pad % tm == 0:
            return tm
    return n_pad


def _pick_col_tile(n_pad, cap):
    budget = int(cap * 0.55)               # headroom for I/O double-buffers
    per_col = 6 * 4 * n_pad                # ~6 live f32 (tn, N) temporaries
    for tn in (n_pad, 2048, 1024, 512, 256, 128):
        if tn <= n_pad and n_pad % tn == 0 and tn * per_col <= budget:
            return tn
    return 128


def _disco_vmem_limit(n_pad, tn, cap):
    lane_vec = 8 * n_pad * 4               # (1, N) block padded to 8 sublanes
    col_vec = tn * 128 * 4                 # (tn, 1) block padded to 128 lanes
    io = 2 * (2 * lane_vec + 3 * col_vec + 3 * lane_vec)   # double-buffered
    temps = 6 * tn * n_pad * 4
    est = int(1.3 * (temps + io)) + (2 << 20)
    return int(min(cap - (2 << 20), max(32 << 20, est)))


# ----------------------------------------------------------------------------
# Wrapper reproducing MulticlassDecorrelatedLoss.forward
# ----------------------------------------------------------------------------
def multiclass_decorrelated_loss(outputs, labels, event, weights=None,
                                 lam=0.1, weighted=True, col_tile=None):
    outputs = jnp.asarray(outputs, jnp.float32)
    n, c = outputs.shape

    labels_i = jnp.reshape(jnp.asarray(labels), (n,)).astype(jnp.int32)
    if (not weighted) or (weights is None):
        w = jnp.ones((n,), jnp.float32)
    else:
        w = jnp.reshape(jnp.asarray(weights), (n,)).astype(jnp.float32)
    ev = jnp.reshape(jnp.asarray(event), (n,)).astype(jnp.float32)

    # ---- zero-weight pad N to a multiple of 128 (keeps the tiled path) ----
    n_pad = ((n + 127) // 128) * 128
    pad = n_pad - n
    if pad:
        outputs_p = jnp.pad(outputs, ((0, pad), (0, 0)))
        labels_p = jnp.pad(labels_i, (0, pad))
        w_p = jnp.pad(w, (0, pad))
        ev_p = jnp.pad(ev, (0, pad))
    else:
        outputs_p, labels_p, w_p, ev_p = outputs, labels_i, w, ev

    # ---------------- CE + softmax (batch-tiled, fully parallel) ----------
    tm = _pick_row_tile(n_pad)
    nb = n_pad // tm
    wce, probs = pl.pallas_call(
        _ce_softmax_kernel,
        out_shape=(jax.ShapeDtypeStruct((n_pad, 1), jnp.float32),
                   jax.ShapeDtypeStruct((n_pad, c), jnp.float32)),
        grid=(nb,),
        in_specs=[pl.BlockSpec((tm, c), lambda i: (i, 0)),
                  pl.BlockSpec((tm, 1), lambda i: (i, 0)),
                  pl.BlockSpec((tm, 1), lambda i: (i, 0))],
        out_specs=(pl.BlockSpec((tm, 1), lambda i: (i, 0)),
                   pl.BlockSpec((tm, c), lambda i: (i, 0))),
        compiler_params=pltpu.CompilerParams(
            dimension_semantics=("parallel",)),
    )(outputs_p, labels_p.reshape(n_pad, 1), w_p.reshape(n_pad, 1))
    ce = jnp.sum(wce) / n

    # ---------------- distance-correlation statistics ---------------------
    inv_n = 1.0 / n
    nw = w_p * (n / jnp.sum(w_p))           # normed weights (padded rows = 0)

    # Event appended as pseudo-class C: event-side stats (bbar, dVar_event)
    # come out of the same kernel exactly once.
    x_rows = jnp.concatenate([probs.T, ev_p.reshape(1, n_pad)],
                             axis=0).reshape(c + 1, 1, n_pad)   # lane-dense
    x_cols = x_rows.reshape(c + 1, n_pad, 1)    # tiny copy for (tn,1) slices
    e_row = ev_p.reshape(1, n_pad)
    e_col = ev_p.reshape(n_pad, 1)
    w_col = nw.reshape(n_pad, 1)

    cap = _vmem_capacity_bytes()
    tn = col_tile if col_tile is not None else _pick_col_tile(n_pad, cap)
    assert n_pad % tn == 0, (n_pad, tn)
    ct = n_pad // tn

    asum_acc, aasum_acc, absum_acc = pl.pallas_call(
        _disco_stats_kernel,
        out_shape=(jax.ShapeDtypeStruct((c + 1, 1, n_pad), jnp.float32),
                   jax.ShapeDtypeStruct((c + 1, 1, n_pad), jnp.float32),
                   jax.ShapeDtypeStruct((c + 1, 1, n_pad), jnp.float32)),
        grid=(c + 1, ct),
        in_specs=[pl.BlockSpec((1, 1, n_pad), lambda i, t: (i, 0, 0)),
                  pl.BlockSpec((1, tn, 1), lambda i, t: (i, t, 0)),
                  pl.BlockSpec((1, n_pad), lambda i, t: (0, 0)),
                  pl.BlockSpec((tn, 1), lambda i, t: (t, 0)),
                  pl.BlockSpec((tn, 1), lambda i, t: (t, 0))],
        out_specs=(pl.BlockSpec((1, 1, n_pad), lambda i, t: (i, 0, 0)),
                   pl.BlockSpec((1, 1, n_pad), lambda i, t: (i, 0, 0)),
                   pl.BlockSpec((1, 1, n_pad), lambda i, t: (i, 0, 0))),
        compiler_params=pltpu.CompilerParams(
            dimension_semantics=("parallel", "arbitrary"),
            vmem_limit_bytes=_disco_vmem_limit(n_pad, tn, cap)),
    )(x_rows, x_cols, e_row, e_col, w_col)

    # ---------------- tiny O(C*N) epilogue (plain JAX glue) ---------------
    abar = asum_acc[:, 0, :] * inv_n              # (C+1, N) weighted row means
    bbar = abar[c]                                # event-side row means
    s = jnp.sum(abar * nw, axis=1) * inv_n        # S_a per class (S_b at [c])
    q = jnp.sum(abar * abar * nw, axis=1)         # sum_j w_j abar_j^2
    r = jnp.sum(abar * bbar * nw, axis=1)         # sum_j w_j abar_j bbar_j
    taa = jnp.sum(aasum_acc[:, 0, :] * nw, axis=1)
    tab = jnp.sum(absum_acc[:, 0, :] * nw, axis=1)

    dvar = taa * inv_n * inv_n - 2.0 * q * inv_n + s * s        # (C+1,)
    dcov = tab * inv_n * inv_n - 2.0 * r * inv_n + s * s[c]     # (C+1,)
    dbb = dvar[c]                                               # event dVar
    dcorr = dcov[:c] * lax.rsqrt(dvar[:c] * dbb)                # power == 1
    disco = jnp.sum(dcorr) / c

    return {'ce': ce, 'disco': disco, 'tot': ce + lam * disco}


# ----------------------------------------------------------------------------
# Pure-JAX reference (mirrors the PyTorch code) for correctness checks.
# ----------------------------------------------------------------------------
def _ref_distance_corr(v1, v2, w):
    amat = jnp.abs(v1[:, None] - v1[None, :])
    bmat = jnp.abs(v2[:, None] - v2[None, :])
    amatavg = jnp.mean(amat * w, axis=1)
    Amat = amat - amatavg[None, :] - amatavg[:, None] + jnp.mean(amatavg * w)
    bmatavg = jnp.mean(bmat * w, axis=1)
    Bmat = bmat - bmatavg[None, :] - bmatavg[:, None] + jnp.mean(bmatavg * w)
    ABavg = jnp.mean(Amat * Bmat * w, axis=1)
    AAavg = jnp.mean(Amat * Amat * w, axis=1)
    BBavg = jnp.mean(Bmat * Bmat * w, axis=1)
    return jnp.mean(ABavg * w) / jnp.sqrt(jnp.mean(AAavg * w) *
                                          jnp.mean(BBavg * w))


def _reference(outputs, labels, event, weights, lam=0.1):
    n, c = outputs.shape
    labels = jnp.reshape(labels, (n,)).astype(jnp.int32)
    w = jnp.reshape(weights, (n,)).astype(jnp.float32)
    logits = outputs.astype(jnp.float32)
    logp = jax.nn.log_softmax(logits, axis=1)
    ce = -jnp.take_along_axis(logp, labels[:, None], axis=1)[:, 0] * w
    probs = jax.nn.softmax(logits, axis=1)
    nw = w * n / jnp.sum(w)
    ev = jnp.reshape(event, (n,)).astype(jnp.float32)
    disco = 0.0
    for i in range(c):
        disco = disco + _ref_distance_corr(probs[:, i], ev, nw)
    disco = disco / c
    return {'ce': jnp.mean(ce), 'disco': disco,
            'tot': jnp.mean(ce) + lam * disco}


if __name__ == "__main__":
    key = jax.random.PRNGKey(0)
    k = jax.random.split(key, 8)
    tol = {'ce': 2e-4, 'disco': 2e-3, 'tot': 2e-3}

    # Config 1: tiny batch (exercises zero-weight padding 16 -> 128).
    N, C = 16, 4
    outputs = jax.random.normal(k[0], (N, C), dtype=jnp.float32)
    labels = jax.random.randint(k[1], (N,), 0, C)
    event = jax.random.uniform(k[2], (N,), jnp.float32, 50.0, 200.0)
    weights = jax.random.uniform(k[3], (N, 1), jnp.float32, 0.5, 1.5)

    res = multiclass_decorrelated_loss(outputs, labels, event, weights,
                                       lam=0.1, weighted=True)
    jax.block_until_ready(res)
    ref = _reference(outputs, labels, event, weights, lam=0.1)
    for name in ('ce', 'disco', 'tot'):
        got, exp = float(res[name]), float(ref[name])
        assert abs(got - exp) <= tol[name] * max(1.0, abs(exp)), (name, got, exp)

    # Config 2: N not a multiple of 128 + forced column tiling (ct > 1),
    # exercising padding inside a later tile and accumulation over t.
    N2, C2 = 250, 3
    outputs2 = jax.random.normal(k[4], (N2, C2), dtype=jnp.float32)
    labels2 = jax.random.randint(k[5], (N2,), 0, C2)
    event2 = jax.random.uniform(k[6], (N2,), jnp.float32, 50.0, 200.0)
    weights2 = jax.random.uniform(k[7], (N2, 1), jnp.float32, 0.5, 1.5)

    res2 = multiclass_decorrelated_loss(outputs2, labels2, event2, weights2,
                                        lam=0.1, weighted=True, col_tile=128)
    jax.block_until_ready(res2)
    ref2 = _reference(outputs2, labels2, event2, weights2, lam=0.1)
    for name in ('ce', 'disco', 'tot'):
        got, exp = float(res2[name]), float(ref2[name])
        assert abs(got - exp) <= tol[name] * max(1.0, abs(exp)), (name, got, exp)

    print("KERNEL_OK")
</pallas_src>

<mosaic_0001>
module attributes {stable_mosaic.version = 11 : i64} {
  func.func @_ce_softmax_kernel(%arg0: i32, %arg1: memref<128x4xf32, #tpu.memory_space<vmem>>, %arg2: memref<128x1xi32, #tpu.memory_space<vmem>>, %arg3: memref<128x1xf32, #tpu.memory_space<vmem>>, %arg4: memref<128x1xf32, #tpu.memory_space<vmem>>, %arg5: memref<128x4xf32, #tpu.memory_space<vmem>>) attributes {dimension_semantics = [#tpu.dimension_semantics<parallel>], iteration_bounds = array<i64: 1>, scalar_prefetch = 0 : i64, scratch_operands = 0 : i64, tpu.core_type = #tpu.core_type<tc>, window_params = [{transform_indices = @transform_0, window_bounds = array<i64: 128, 4>}, {transform_indices = @transform_1, window_bounds = array<i64: 128, 1>}, {transform_indices = @transform_2, window_bounds = array<i64: 128, 1>}, {transform_indices = @transform_3, window_bounds = array<i64: 128, 1>}, {transform_indices = @transform_4, window_bounds = array<i64: 128, 4>}]} {
    %c0 = arith.constant 0 : index
    %c0_0 = arith.constant 0 : index
    %0 = vector.load %arg1[%c0, %c0_0] : memref<128x4xf32, #tpu.memory_space<vmem>>, vector<128x4xf32>
    %cst = arith.constant dense<0xFF800000> : vector<128xf32>
    %1 = vector.multi_reduction <maximumf>, %0, %cst [1] : vector<128x4xf32> to vector<128xf32>
    %2 = vector.shape_cast %1 : vector<128xf32> to vector<128x1xf32>
    %3 = vector.broadcast %2 : vector<128x1xf32> to vector<128x4xf32>
    %4 = arith.subf %0, %3 : vector<128x4xf32>
    %5 = math.exp %4 : vector<128x4xf32>
    %cst_1 = arith.constant dense<0.000000e+00> : vector<128xf32>
    %6 = vector.multi_reduction <add>, %5, %cst_1 [1] : vector<128x4xf32> to vector<128xf32>
    %7 = vector.shape_cast %6 : vector<128xf32> to vector<128x1xf32>
    %8 = tpu.reciprocal %7 : vector<128x1xf32> -> vector<128x1xf32>
    %9 = vector.broadcast %8 : vector<128x1xf32> to vector<128x4xf32>
    %10 = arith.mulf %5, %9 : vector<128x4xf32>
    %c0_2 = arith.constant 0 : index
    %c0_3 = arith.constant 0 : index
    %11 = vector.load %arg5[%c0_2, %c0_3] : memref<128x4xf32, #tpu.memory_space<vmem>>, vector<128x4xf32>
    tpu.vector_store %arg5[%c0_2, %c0_3], %10 {strides = array<i32>} : memref<128x4xf32, #tpu.memory_space<vmem>>, vector<128x4xf32>,
    %12 = math.log %7 : vector<128x1xf32>
    %13 = vector.broadcast %12 : vector<128x1xf32> to vector<128x4xf32>
    %14 = arith.subf %4, %13 : vector<128x4xf32>
    %15 = tpu.iota {dimensions = array<i32: 1>} : vector<128x4xi32>
    %c0_4 = arith.constant 0 : index
    %c0_5 = arith.constant 0 : index
    %16 = vector.load %arg2[%c0_4, %c0_5] : memref<128x1xi32, #tpu.memory_space<vmem>>, vector<128x1xi32>
    %17 = vector.broadcast %16 : vector<128x1xi32> to vector<128x4xi32>
    %18 = arith.cmpi eq, %15, %17 : vector<128x4xi32>
    %19 = arith.extui %18 : vector<128x4xi1> to vector<128x4xi32>
    %20 = arith.sitofp %19 : vector<128x4xi32> to vector<128x4xf32>
    %21 = arith.mulf %14, %20 : vector<128x4xf32>
    %cst_6 = arith.constant dense<0.000000e+00> : vector<128xf32>
    %22 = vector.multi_reduction <add>, %21, %cst_6 [1] : vector<128x4xf32> to vector<128xf32>
    %23 = vector.shape_cast %22 : vector<128xf32> to vector<128x1xf32>
    %cst_7 = arith.constant 0.000000e+00 : f32
    %24 = vector.broadcast %cst_7 : f32 to vector<128x1xf32>
    %25 = arith.subf %24, %23 : vector<128x1xf32>
    %c0_8 = arith.constant 0 : index
    %c0_9 = arith.constant 0 : index
    %26 = vector.load %arg3[%c0_8, %c0_9] : memref<128x1xf32, #tpu.memory_space<vmem>>, vector<128x1xf32>
    %27 = arith.mulf %25, %26 : vector<128x1xf32>
    %c0_10 = arith.constant 0 : index
    %c0_11 = arith.constant 0 : index
    %28 = vector.load %arg4[%c0_10, %c0_11] : memref<128x1xf32, #tpu.memory_space<vmem>>, vector<128x1xf32>
    tpu.vector_store %arg4[%c0_10, %c0_11], %27 {strides = array<i32>} : memref<128x1xf32, #tpu.memory_space<vmem>>, vector<128x1xf32>,
    return
  }
  func.func @transform_0(%arg0: i32) -> (i32, i32) {
    %c0_i32 = arith.constant 0 : i32
    %c0_i32_0 = arith.constant 0 : i32
    return %arg0, %c0_i32 : i32, i32
  }
  func.func @transform_1(%arg0: i32) -> (i32, i32) {
    %c0_i32 = arith.constant 0 : i32
    %c0_i32_0 = arith.constant 0 : i32
    return %arg0, %c0_i32 : i32, i32
  }
  func.func @transform_2(%arg0: i32) -> (i32, i32) {
    %c0_i32 = arith.constant 0 : i32
    %c0_i32_0 = arith.constant 0 : i32
    return %arg0, %c0_i32 : i32, i32
  }
  func.func @transform_3(%arg0: i32) -> (i32, i32) {
    %c0_i32 = arith.constant 0 : i32
    %c0_i32_0 = arith.constant 0 : i32
    return %arg0, %c0_i32 : i32, i32
  }
  func.func @transform_4(%arg0: i32) -> (i32, i32) {
    %c0_i32 = arith.constant 0 : i32
    %c0_i32_0 = arith.constant 0 : i32
    return %arg0, %c0_i32 : i32, i32
  }
}

</mosaic_0001>

<llo_original>
// kernel: tpu_custom_call.1
$region0: #{tpu_custom_call.1}
  #allocation0 [shape = 'u32[]', space=smem, size = 0x4, offset = 0x4, fixed_abs, tag = 'smem constant byte address 0x4 - core index']
  #allocation1 [shape = 'u32[144,128]{1,0:T(1,128)}', space=vmem, size = 0x12000, scoped, tag = 'internal scratch']
  %s0 = inlined_call_operand.vmem [shape: f32[128,4], index: 0, kind: input, shape index: {}]
  %s1 = inlined_call_operand.vmem [shape: s32[128,1], index: 1, kind: input, shape index: {}]
  %s2 = inlined_call_operand.vmem [shape: f32[128,1], index: 2, kind: input, shape index: {}]
  %s3 = inlined_call_operand.vmem [shape: f32[128,1], index: 3, kind: output, shape index: {0}]
  %s4 = inlined_call_operand.vmem [shape: f32[128,4], index: 4, kind: output, shape index: {1}]
  %5 = xla_tuple %s3, %s4
  %s6 = sld [smem:[#allocation0]]
  $region30: #{tpu_custom_call.1} parent=0
    _
  %s8 = ssub.s32 1, %s6
  %s9 = scalar_select 0, %s8, %s6
  // Predicated region
  $region2: #{tpu_custom_call.1} parent=0 // pred_check
    _
  $region3: #{tpu_custom_call.1} parent=0 // pred_check_branch
    %11 = sbr.rel (0) target = $region5
  $region4: #{tpu_custom_call.1} parent=0 // pred_region
    _
  $region5: #{tpu_custom_call.1} parent=0 // pred_fallthru
    _
  // Predicated region
  $region6: #{tpu_custom_call.1} parent=0 // pred_check
    _
  $region7: #{tpu_custom_call.1} parent=0 // pred_check_branch
    %13 = sbr.rel (0) target = $region9
  $region8: #{tpu_custom_call.1} parent=0 // pred_region
    _
  $region9: #{tpu_custom_call.1} parent=0 // pred_fallthru
    _
  // Predicated region
  $region10: #{tpu_custom_call.1} parent=0 // pred_check
    _
  $region11: #{tpu_custom_call.1} parent=0 // pred_check_branch
    %15 = sbr.rel (0) target = $region13
  $region12: #{tpu_custom_call.1} parent=0 // pred_region
    _
  $region13: #{tpu_custom_call.1} parent=0 // pred_fallthru
    _
  %v16 = vld [vmem:[%s0] sm:$0xff]
  %v17 = vld [vmem:[%s0 + $0x8] sm:$0xff]
  %v18 = vld [vmem:[%s0 + $0x10] sm:$0xff]
  %v19 = vld [vmem:[%s0 + $0x18] sm:$0xff]
  %v20 = vld [vmem:[%s0 + $0x20] sm:$0xff]
  %v21 = vld [vmem:[%s0 + $0x28] sm:$0xff]
  %v22 = vld [vmem:[%s0 + $0x30] sm:$0xff]
  %v23 = vld [vmem:[%s0 + $0x38] sm:$0xff]
  %v24 = vld [vmem:[%s0 + $0x40] sm:$0xff]
  %v25 = vld [vmem:[%s0 + $0x48] sm:$0xff]
  %v26 = vld [vmem:[%s0 + $0x50] sm:$0xff]
  %v27 = vld [vmem:[%s0 + $0x58] sm:$0xff]
  %v28 = vld [vmem:[%s0 + $0x60] sm:$0xff]
  %v29 = vld [vmem:[%s0 + $0x68] sm:$0xff]
  %v30 = vld [vmem:[%s0 + $0x70] sm:$0xff]
  %v31 = vld [vmem:[%s0 + $0x78] sm:$0xff]
  %vm32 = vcmask 31744
  %v33 = vsel %vm32, %v16, -inf
  %34 = vmax.xlane.f32.xlu0 %v33
  %v35 = vpop.xlane.xlu0 %34
  %v36 = vsel %vm32, %v17, -inf
  %37 = vmax.xlane.f32.xlu0 %v36
  %v38 = vpop.xlane.xlu0 %37
  %v39 = vsel %vm32, %v18, -inf
  %40 = vmax.xlane.f32.xlu0 %v39
  %v41 = vpop.xlane.xlu0 %40
  %v42 = vsel %vm32, %v19, -inf
  %43 = vmax.xlane.f32.xlu0 %v42
  %v44 = vpop.xlane.xlu0 %43
  %v45 = vsel %vm32, %v20, -inf
  %46 = vmax.xlane.f32.xlu0 %v45
  %v47 = vpop.xlane.xlu0 %46
  %v48 = vsel %vm32, %v21, -inf
  %49 = vmax.xlane.f32.xlu0 %v48
  %v50 = vpop.xlane.xlu0 %49
  %v51 = vsel %vm32, %v22, -inf
  %52 = vmax.xlane.f32.xlu0 %v51
  %v53 = vpop.xlane.xlu0 %52
  %v54 = vsel %vm32, %v23, -inf
  %55 = vmax.xlane.f32.xlu0 %v54
  %v56 = vpop.xlane.xlu0 %55
  %v57 = vsel %vm32, %v24, -inf
  %58 = vmax.xlane.f32.xlu0 %v57
  %v59 = vpop.xlane.xlu0 %58
  %v60 = vsel %vm32, %v25, -inf
  %61 = vmax.xlane.f32.xlu0 %v60
  %v62 = vpop.xlane.xlu0 %61
  %v63 = vsel %vm32, %v26, -inf
  %64 = vmax.xlane.f32.xlu0 %v63
  %v65 = vpop.xlane.xlu0 %64
  %v66 = vsel %vm32, %v27, -inf
  %67 = vmax.xlane.f32.xlu0 %v66
  %v68 = vpop.xlane.xlu0 %67
  %v69 = vsel %vm32, %v28, -inf
  %70 = vmax.xlane.f32.xlu0 %v69
  %v71 = vpop.xlane.xlu0 %70
  %v72 = vsel %vm32, %v29, -inf
  %73 = vmax.xlane.f32.xlu0 %v72
  %v74 = vpop.xlane.xlu0 %73
  %v75 = vsel %vm32, %v30, -inf
  %76 = vmax.xlane.f32.xlu0 %v75
  %v77 = vpop.xlane.xlu0 %76
  %v78 = vsel %vm32, %v31, -inf
  %79 = vmax.xlane.f32.xlu0 %v78
  %v80 = vpop.xlane.xlu0 %79
  %v81 = vsub.f32 %v16, %v35
  %v82 = vsub.f32 %v17, %v38
  %v83 = vsub.f32 %v18, %v41
  %v84 = vsub.f32 %v19, %v44
  %v85 = vsub.f32 %v20, %v47
  %v86 = vsub.f32 %v21, %v50
  %v87 = vsub.f32 %v22, %v53
  %v88 = vsub.f32 %v23, %v56
  %v89 = vsub.f32 %v24, %v59
  %v90 = vsub.f32 %v25, %v62
  %v91 = vsub.f32 %v26, %v65
  %v92 = vsub.f32 %v27, %v68
  %v93 = vsub.f32 %v28, %v71
  %v94 = vsub.f32 %v29, %v74
  %v95 = vsub.f32 %v30, %v77
  %v96 = vsub.f32 %v31, %v80
  %v97 = vmul.f32 %v81, 1.442695
  %v98 = vpow.pop %v97
  %v99 = vmul.f32 %v82, 1.442695
  %v100 = vpow.pop %v99
  %v101 = vmul.f32 %v83, 1.442695
  %v102 = vpow.pop %v101
  %v103 = vmul.f32 %v84, 1.442695
  %v104 = vpow.pop %v103
  %v105 = vmul.f32 %v85, 1.442695
  %v106 = vpow.pop %v105
  %v107 = vmul.f32 %v86, 1.442695
  %v108 = vpow.pop %v107
  %v109 = vmul.f32 %v87, 1.442695
  %v110 = vpow.pop %v109
  %v111 = vmul.f32 %v88, 1.442695
  %v112 = vpow.pop %v111
  %v113 = vmul.f32 %v89, 1.442695
  %v114 = vpow.pop %v113
  %v115 = vmul.f32 %v90, 1.442695
  %v116 = vpow.pop %v115
  %v117 = vmul.f32 %v91, 1.442695
  %v118 = vpow.pop %v117
  %v119 = vmul.f32 %v92, 1.442695
  %v120 = vpow.pop %v119
  %v121 = vmul.f32 %v93, 1.442695
  %v122 = vpow.pop %v121
  %v123 = vmul.f32 %v94, 1.442695
  %v124 = vpow.pop %v123
  %v125 = vmul.f32 %v95, 1.442695
  %v126 = vpow.pop %v125
  %v127 = vmul.f32 %v96, 1.442695
  %v128 = vpow.pop %v127
  %v129 = vsel %vm32, %v98, 0.0
  %130 = vadd.xlane.f32.xlu0 %v129
  %v131 = vpop.xlane.xlu0 %130
  %v132 = vsel %vm32, %v100, 0.0
  %133 = vadd.xlane.f32.xlu0 %v132
  %v134 = vpop.xlane.xlu0 %133
  %v135 = vsel %vm32, %v102, 0.0
  %136 = vadd.xlane.f32.xlu0 %v135
  %v137 = vpop.xlane.xlu0 %136
  %v138 = vsel %vm32, %v104, 0.0
  %139 = vadd.xlane.f32.xlu0 %v138
  %v140 = vpop.xlane.xlu0 %139
  %v141 = vsel %vm32, %v106, 0.0
  %142 = vadd.xlane.f32.xlu0 %v141
  %v143 = vpop.xlane.xlu0 %142
  %v144 = vsel %vm32, %v108, 0.0
  %145 = vadd.xlane.f32.xlu0 %v144
  %v146 = vpop.xlane.xlu0 %145
  %v147 = vsel %vm32, %v110, 0.0
  %148 = vadd.xlane.f32.xlu0 %v147
  %v149 = vpop.xlane.xlu0 %148
  %v150 = vsel %vm32, %v112, 0.0
  %151 = vadd.xlane.f32.xlu0 %v150
  %v152 = vpop.xlane.xlu0 %151
  %v153 = vsel %vm32, %v114, 0.0
  %154 = vadd.xlane.f32.xlu0 %v153
  %v155 = vpop.xlane.xlu0 %154
  %v156 = vsel %vm32, %v116, 0.0
  %157 = vadd.xlane.f32.xlu0 %v156
  %v158 = vpop.xlane.xlu0 %157
  %v159 = vsel %vm32, %v118, 0.0
  %160 = vadd.xlane.f32.xlu0 %v159
  %v161 = vpop.xlane.xlu0 %160
  %v162 = vsel %vm32, %v120, 0.0
  %163 = vadd.xlane.f32.xlu0 %v162
  %v164 = vpop.xlane.xlu0 %163
  %v165 = vsel %vm32, %v122, 0.0
  %166 = vadd.xlane.f32.xlu0 %v165
  %v167 = vpop.xlane.xlu0 %166
  %v168 = vsel %vm32, %v124, 0.0
  %169 = vadd.xlane.f32.xlu0 %v168
  %v170 = vpop.xlane.xlu0 %169
  %v171 = vsel %vm32, %v126, 0.0
  %172 = vadd.xlane.f32.xlu0 %v171
  %v173 = vpop.xlane.xlu0 %172
  %v174 = vsel %vm32, %v128, 0.0
  %175 = vadd.xlane.f32.xlu0 %v174
  %v176 = vpop.xlane.xlu0 %175
  %v177 = vrcp.pop %v131
  %v178 = vrcp.pop %v134
  %v179 = vrcp.pop %v137
  %v180 = vrcp.pop %v140
  %v181 = vrcp.pop %v143
  %v182 = vrcp.pop %v146
  %v183 = vrcp.pop %v149
  %v184 = vrcp.pop %v152
  %v185 = vrcp.pop %v155
  %v186 = vrcp.pop %v158
  %v187 = vrcp.pop %v161
  %v188 = vrcp.pop %v164
  %v189 = vrcp.pop %v167
  %v190 = vrcp.pop %v170
  %v191 = vrcp.pop %v173
  %v192 = vrcp.pop %v176
  %v193 = vmul.f32 %v98, %v177
  %v194 = vmul.f32 %v100, %v178
  %v195 = vmul.f32 %v102, %v179
  %v196 = vmul.f32 %v104, %v180
  %v197 = vmul.f32 %v106, %v181
  %v198 = vmul.f32 %v108, %v182
  %v199 = vmul.f32 %v110, %v183
  %v200 = vmul.f32 %v112, %v184
  %v201 = vmul.f32 %v114, %v185
  %v202 = vmul.f32 %v116, %v186
  %v203 = vmul.f32 %v118, %v187
  %v204 = vmul.f32 %v120, %v188
  %v205 = vmul.f32 %v122, %v189
  %v206 = vmul.f32 %v124, %v190
  %v207 = vmul.f32 %v126, %v191
  %v208 = vmul.f32 %v128, %v192
  %209 = vst.msk [vmem:[%s4] sm:$0xff] %vm32, %v193
  %210 = vst.msk [vmem:[%s4 + $0x8] sm:$0xff] %vm32, %v194
  %211 = vst.msk [vmem:[%s4 + $0x10] sm:$0xff] %vm32, %v195
  %212 = vst.msk [vmem:[%s4 + $0x18] sm:$0xff] %vm32, %v196
  %213 = vst.msk [vmem:[%s4 + $0x20] sm:$0xff] %vm32, %v197
  %214 = vst.msk [vmem:[%s4 + $0x28] sm:$0xff] %vm32, %v198
  %215 = vst.msk [vmem:[%s4 + $0x30] sm:$0xff] %vm32, %v199
  %216 = vst.msk [vmem:[%s4 + $0x38] sm:$0xff] %vm32, %v200
  %217 = vst.msk [vmem:[%s4 + $0x40] sm:$0xff] %vm32, %v201
  %218 = vst.msk [vmem:[%s4 + $0x48] sm:$0xff] %vm32, %v202
  %219 = vst.msk [vmem:[%s4 + $0x50] sm:$0xff] %vm32, %v203
  %220 = vst.msk [vmem:[%s4 + $0x58] sm:$0xff] %vm32, %v204
  %221 = vst.msk [vmem:[%s4 + $0x60] sm:$0xff] %vm32, %v205
  %222 = vst.msk [vmem:[%s4 + $0x68] sm:$0xff] %vm32, %v206
  %223 = vst.msk [vmem:[%s4 + $0x70] sm:$0xff] %vm32, %v207
  %224 = vst.msk [vmem:[%s4 + $0x78] sm:$0xff] %vm32, %v208
  %v225 = vlog2.pop %v131
  %v226 = vmul.f32 %v225, 0.6931472
  %v227 = vlog2.pop %v134
  %v228 = vmul.f32 %v227, 0.6931472
  %v229 = vlog2.pop %v137
  %v230 = vmul.f32 %v229, 0.6931472
  %v231 = vlog2.pop %v140
  %v232 = vmul.f32 %v231, 0.6931472
  %v233 = vlog2.pop %v143
  %v234 = vmul.f32 %v233, 0.6931472
  %v235 = vlog2.pop %v146
  %v236 = vmul.f32 %v235, 0.6931472
  %v237 = vlog2.pop %v149
  %v238 = vmul.f32 %v237, 0.6931472
  %v239 = vlog2.pop %v152
  %v240 = vmul.f32 %v239, 0.6931472
  %v241 = vlog2.pop %v155
  %v242 = vmul.f32 %v241, 0.6931472
  %v243 = vlog2.pop %v158
  %v244 = vmul.f32 %v243, 0.6931472
  %v245 = vlog2.pop %v161
  %v246 = vmul.f32 %v245, 0.6931472
  %v247 = vlog2.pop %v164
  %v248 = vmul.f32 %v247, 0.6931472
  %v249 = vlog2.pop %v167
  %v250 = vmul.f32 %v249, 0.6931472
  %v251 = vlog2.pop %v170
  %v252 = vmul.f32 %v251, 0.6931472
  %v253 = vlog2.pop %v173
  %v254 = vmul.f32 %v253, 0.6931472
  %v255 = vlog2.pop %v176
  %v256 = vmul.f32 %v255, 0.6931472
  %v257 = vsub.f32 %v81, %v226
  %v258 = vsub.f32 %v82, %v228
  %v259 = vsub.f32 %v83, %v230
  %v260 = vsub.f32 %v84, %v232
  %v261 = vsub.f32 %v85, %v234
  %v262 = vsub.f32 %v86, %v236
  %v263 = vsub.f32 %v87, %v238
  %v264 = vsub.f32 %v88, %v240
  %v265 = vsub.f32 %v89, %v242
  %v266 = vsub.f32 %v90, %v244
  %v267 = vsub.f32 %v91, %v246
  %v268 = vsub.f32 %v92, %v248
  %v269 = vsub.f32 %v93, %v250
  %v270 = vsub.f32 %v94, %v252
  %v271 = vsub.f32 %v95, %v254
  %v272 = vsub.f32 %v96, %v256
  %v273 = vlaneseq
  %v274 = vand.u32 %v273, 127
  %v275 = vld [vmem:[%s1] sm:$0xff]
  %v276 = vld [vmem:[%s1 + $0x8] sm:$0xff]
  %v277 = vld [vmem:[%s1 + $0x10] sm:$0xff]
  %v278 = vld [vmem:[%s1 + $0x18] sm:$0xff]
  %v279 = vld [vmem:[%s1 + $0x20] sm:$0xff]
  %v280 = vld [vmem:[%s1 + $0x28] sm:$0xff]
  %v281 = vld [vmem:[%s1 + $0x30] sm:$0xff]
  %v282 = vld [vmem:[%s1 + $0x38] sm:$0xff]
  %v283 = vld [vmem:[%s1 + $0x40] sm:$0xff]
  %v284 = vld [vmem:[%s1 + $0x48] sm:$0xff]
  %v285 = vld [vmem:[%s1 + $0x50] sm:$0xff]
  %v286 = vld [vmem:[%s1 + $0x58] sm:$0xff]
  %v287 = vld [vmem:[%s1 + $0x60] sm:$0xff]
  %v288 = vld [vmem:[%s1 + $0x68] sm:$0xff]
  %v289 = vld [vmem:[%s1 + $0x70] sm:$0xff]
  %v290 = vld [vmem:[%s1 + $0x78] sm:$0xff]
  %291 = vset.pattern.permute.xlu0 0
  %292 = vperm.xlu0 %291, %v275
  %v293 = vpop.permute.xlu0 %292
  %294 = vset.pattern.permute.xlu0 0
  %295 = vperm.xlu0 %294, %v276
  %v296 = vpop.permute.xlu0 %295
  %297 = vset.pattern.permute.xlu0 0
  %298 = vperm.xlu0 %297, %v277
  %v299 = vpop.permute.xlu0 %298
  %300 = vset.pattern.permute.xlu0 0
  %301 = vperm.xlu0 %300, %v278
  %v302 = vpop.permute.xlu0 %301
  %303 = vset.pattern.permute.xlu0 0
  %304 = vperm.xlu0 %303, %v279
  %v305 = vpop.permute.xlu0 %304
  %306 = vset.pattern.permute.xlu0 0
  %307 = vperm.xlu0 %306, %v280
  %v308 = vpop.permute.xlu0 %307
  %309 = vset.pattern.permute.xlu0 0
  %310 = vperm.xlu0 %309, %v281
  %v311 = vpop.permute.xlu0 %310
  %312 = vset.pattern.permute.xlu0 0
  %313 = vperm.xlu0 %312, %v282
  %v314 = vpop.permute.xlu0 %313
  %315 = vset.pattern.permute.xlu0 0
  %316 = vperm.xlu0 %315, %v283
  %v317 = vpop.permute.xlu0 %316
  %318 = vset.pattern.permute.xlu0 0
  %319 = vperm.xlu0 %318, %v284
  %v320 = vpop.permute.xlu0 %319
  %321 = vset.pattern.permute.xlu0 0
  %322 = vperm.xlu0 %321, %v285
  %v323 = vpop.permute.xlu0 %322
  %324 = vset.pattern.permute.xlu0 0
  %325 = vperm.xlu0 %324, %v286
  %v326 = vpop.permute.xlu0 %325
  %327 = vset.pattern.permute.xlu0 0
  %328 = vperm.xlu0 %327, %v287
  %v329 = vpop.permute.xlu0 %328
  %330 = vset.pattern.permute.xlu0 0
  %331 = vperm.xlu0 %330, %v288
  %v332 = vpop.permute.xlu0 %331
  %333 = vset.pattern.permute.xlu0 0
  %334 = vperm.xlu0 %333, %v289
  %v335 = vpop.permute.xlu0 %334
  %336 = vset.pattern.permute.xlu0 0
  %337 = vperm.xlu0 %336, %v290
  %v338 = vpop.permute.xlu0 %337
  %vm339 = vcmp.eq.s32.totalorder %v274, %v293
  %vm340 = vcmp.eq.s32.totalorder %v274, %v296
  %vm341 = vcmp.eq.s32.totalorder %v274, %v299
  %vm342 = vcmp.eq.s32.totalorder %v274, %v302
  %vm343 = vcmp.eq.s32.totalorder %v274, %v305
  %vm344 = vcmp.eq.s32.totalorder %v274, %v308
  %vm345 = vcmp.eq.s32.totalorder %v274, %v311
  %vm346 = vcmp.eq.s32.totalorder %v274, %v314
  %vm347 = vcmp.eq.s32.totalorder %v274, %v317
  %vm348 = vcmp.eq.s32.totalorder %v274, %v320
  %vm349 = vcmp.eq.s32.totalorder %v274, %v323
  %vm350 = vcmp.eq.s32.totalorder %v274, %v326
  %vm351 = vcmp.eq.s32.totalorder %v274, %v329
  %vm352 = vcmp.eq.s32.totalorder %v274, %v332
  %vm353 = vcmp.eq.s32.totalorder %v274, %v335
  %vm354 = vcmp.eq.s32.totalorder %v274, %v338
  %v355 = vsel %vm339, 1, 0
  %v356 = vsel %vm340, 1, 0
  %v357 = vsel %vm341, 1, 0
  %v358 = vsel %vm342, 1, 0
  %v359 = vsel %vm343, 1, 0
  %v360 = vsel %vm344, 1, 0
  %v361 = vsel %vm345, 1, 0
  %v362 = vsel %vm346, 1, 0
  %v363 = vsel %vm347, 1, 0
  %v364 = vsel %vm348, 1, 0
  %v365 = vsel %vm349, 1, 0
  %v366 = vsel %vm350, 1, 0
  %v367 = vsel %vm351, 1, 0
  %v368 = vsel %vm352, 1, 0
  %v369 = vsel %vm353, 1, 0
  %v370 = vsel %vm354, 1, 0
  %v371 = vcvt.s32.f32 %v355
  %v372 = vcvt.s32.f32 %v356
  %v373 = vcvt.s32.f32 %v357
  %v374 = vcvt.s32.f32 %v358
  %v375 = vcvt.s32.f32 %v359
  %v376 = vcvt.s32.f32 %v360
  %v377 = vcvt.s32.f32 %v361
  %v378 = vcvt.s32.f32 %v362
  %v379 = vcvt.s32.f32 %v363
  %v380 = vcvt.s32.f32 %v364
  %v381 = vcvt.s32.f32 %v365
  %v382 = vcvt.s32.f32 %v366
  %v383 = vcvt.s32.f32 %v367
  %v384 = vcvt.s32.f32 %v368
  %v385 = vcvt.s32.f32 %v369
  %v386 = vcvt.s32.f32 %v370
  %v387 = vmul.f32 %v257, %v371
  %v388 = vmul.f32 %v258, %v372
  %v389 = vmul.f32 %v259, %v373
  %v390 = vmul.f32 %v260, %v374
  %v391 = vmul.f32 %v261, %v375
  %v392 = vmul.f32 %v262, %v376
  %v393 = vmul.f32 %v263, %v377
  %v394 = vmul.f32 %v264, %v378
  %v395 = vmul.f32 %v265, %v379
  %v396 = vmul.f32 %v266, %v380
  %v397 = vmul.f32 %v267, %v381
  %v398 = vmul.f32 %v268, %v382
  %v399 = vmul.f32 %v269, %v383
  %v400 = vmul.f32 %v270, %v384
  %v401 = vmul.f32 %v271, %v385
  %v402 = vmul.f32 %v272, %v386
  %v403 = vsel %vm32, %v387, 0.0
  %404 = vadd.xlane.f32.xlu0 %v403
  %v405 = vpop.xlane.xlu0 %404
  %v406 = vsel %vm32, %v388, 0.0
  %407 = vadd.xlane.f32.xlu0 %v406
  %v408 = vpop.xlane.xlu0 %407
  %v409 = vsel %vm32, %v389, 0.0
  %410 = vadd.xlane.f32.xlu0 %v409
  %v411 = vpop.xlane.xlu0 %410
  %v412 = vsel %vm32, %v390, 0.0
  %413 = vadd.xlane.f32.xlu0 %v412
  %v414 = vpop.xlane.xlu0 %413
  %v415 = vsel %vm32, %v391, 0.0
  %416 = vadd.xlane.f32.xlu0 %v415
  %v417 = vpop.xlane.xlu0 %416
  %v418 = vsel %vm32, %v392, 0.0
  %419 = vadd.xlane.f32.xlu0 %v418
  %v420 = vpop.xlane.xlu0 %419
  %v421 = vsel %vm32, %v393, 0.0
  %422 = vadd.xlane.f32.xlu0 %v421
  %v423 = vpop.xlane.xlu0 %422
  %v424 = vsel %vm32, %v394, 0.0
  %425 = vadd.xlane.f32.xlu0 %v424
  %v426 = vpop.xlane.xlu0 %425
  %v427 = vsel %vm32, %v395, 0.0
  %428 = vadd.xlane.f32.xlu0 %v427
  %v429 = vpop.xlane.xlu0 %428
  %v430 = vsel %vm32, %v396, 0.0
  %431 = vadd.xlane.f32.xlu0 %v430
  %v432 = vpop.xlane.xlu0 %431
  %v433 = vsel %vm32, %v397, 0.0
  %434 = vadd.xlane.f32.xlu0 %v433
  %v435 = vpop.xlane.xlu0 %434
  %v436 = vsel %vm32, %v398, 0.0
  %437 = vadd.xlane.f32.xlu0 %v436
  %v438 = vpop.xlane.xlu0 %437
  %v439 = vsel %vm32, %v399, 0.0
  %440 = vadd.xlane.f32.xlu0 %v439
  %v441 = vpop.xlane.xlu0 %440
  %v442 = vsel %vm32, %v400, 0.0
  %443 = vadd.xlane.f32.xlu0 %v442
  %v444 = vpop.xlane.xlu0 %443
  %v445 = vsel %vm32, %v401, 0.0
  %446 = vadd.xlane.f32.xlu0 %v445
  %v447 = vpop.xlane.xlu0 %446
  %v448 = vsel %vm32, %v402, 0.0
  %449 = vadd.xlane.f32.xlu0 %v448
  %v450 = vpop.xlane.xlu0 %449
  %v451 = vsub.f32 0.0, %v405
  %v452 = vsub.f32 0.0, %v408
  %v453 = vsub.f32 0.0, %v411
  %v454 = vsub.f32 0.0, %v414
  %v455 = vsub.f32 0.0, %v417
  %v456 = vsub.f32 0.0, %v420
  %v457 = vsub.f32 0.0, %v423
  %v458 = vsub.f32 0.0, %v426
  %v459 = vsub.f32 0.0, %v429
  %v460 = vsub.f32 0.0, %v432
  %v461 = vsub.f32 0.0, %v435
  %v462 = vsub.f32 0.0, %v438
  %v463 = vsub.f32 0.0, %v441
  %v464 = vsub.f32 0.0, %v444
  %v465 = vsub.f32 0.0, %v447
  %v466 = vsub.f32 0.0, %v450
  %v467 = vld [vmem:[%s2] sm:$0xff]
  %v468 = vld [vmem:[%s2 + $0x8] sm:$0xff]
  %v469 = vld [vmem:[%s2 + $0x10] sm:$0xff]
  %v470 = vld [vmem:[%s2 + $0x18] sm:$0xff]
  %v471 = vld [vmem:[%s2 + $0x20] sm:$0xff]
  %v472 = vld [vmem:[%s2 + $0x28] sm:$0xff]
  %v473 = vld [vmem:[%s2 + $0x30] sm:$0xff]
  %v474 = vld [vmem:[%s2 + $0x38] sm:$0xff]
  %v475 = vld [vmem:[%s2 + $0x40] sm:$0xff]
  %v476 = vld [vmem:[%s2 + $0x48] sm:$0xff]
  %v477 = vld [vmem:[%s2 + $0x50] sm:$0xff]
  %v478 = vld [vmem:[%s2 + $0x58] sm:$0xff]
  %v479 = vld [vmem:[%s2 + $0x60] sm:$0xff]
  %v480 = vld [vmem:[%s2 + $0x68] sm:$0xff]
  %v481 = vld [vmem:[%s2 + $0x70] sm:$0xff]
  %v482 = vld [vmem:[%s2 + $0x78] sm:$0xff]
  %v483 = vmul.f32 %v451, %v467
  %v484 = vmul.f32 %v452, %v468
  %v485 = vmul.f32 %v453, %v469
  %v486 = vmul.f32 %v454, %v470
  %v487 = vmul.f32 %v455, %v471
  %v488 = vmul.f32 %v456, %v472
  %v489 = vmul.f32 %v457, %v473
  %v490 = vmul.f32 %v458, %v474
  %v491 = vmul.f32 %v459, %v475
  %v492 = vmul.f32 %v460, %v476
  %v493 = vmul.f32 %v461, %v477
  %v494 = vmul.f32 %v462, %v478
  %v495 = vmul.f32 %v463, %v479
  %v496 = vmul.f32 %v464, %v480
  %v497 = vmul.f32 %v465, %v481
  %v498 = vmul.f32 %v466, %v482
  %vm499 = vcmask 7168
  %500 = vst.msk [vmem:[%s3] sm:$0xff] %vm499, %v483
  %501 = vst.msk [vmem:[%s3 + $0x8] sm:$0xff] %vm499, %v484
  %502 = vst.msk [vmem:[%s3 + $0x10] sm:$0xff] %vm499, %v485
  %503 = vst.msk [vmem:[%s3 + $0x18] sm:$0xff] %vm499, %v486
  %504 = vst.msk [vmem:[%s3 + $0x20] sm:$0xff] %vm499, %v487
  %505 = vst.msk [vmem:[%s3 + $0x28] sm:$0xff] %vm499, %v488
  %506 = vst.msk [vmem:[%s3 + $0x30] sm:$0xff] %vm499, %v489
  %507 = vst.msk [vmem:[%s3 + $0x38] sm:$0xff] %vm499, %v490
  %508 = vst.msk [vmem:[%s3 + $0x40] sm:$0xff] %vm499, %v491
  %509 = vst.msk [vmem:[%s3 + $0x48] sm:$0xff] %vm499, %v492
  %510 = vst.msk [vmem:[%s3 + $0x50] sm:$0xff] %vm499, %v493
  %511 = vst.msk [vmem:[%s3 + $0x58] sm:$0xff] %vm499, %v494
  %512 = vst.msk [vmem:[%s3 + $0x60] sm:$0xff] %vm499, %v495
  %513 = vst.msk [vmem:[%s3 + $0x68] sm:$0xff] %vm499, %v496
  %514 = vst.msk [vmem:[%s3 + $0x70] sm:$0xff] %vm499, %v497
  %515 = vst.msk [vmem:[%s3 + $0x78] sm:$0xff] %vm499, %v498
  // Predicated region
  $region14: #{tpu_custom_call.1} parent=0 // pred_check
    _
  $region15: #{tpu_custom_call.1} parent=0 // pred_check_branch
    %517 = sbr.rel (0) target = $region17
  $region16: #{tpu_custom_call.1} parent=0 // pred_region
    _
  $region17: #{tpu_custom_call.1} parent=0 // pred_fallthru
    _
  // Predicated region
  $region18: #{tpu_custom_call.1} parent=0 // pred_check
    _
  $region19: #{tpu_custom_call.1} parent=0 // pred_check_branch
    %519 = sbr.rel (0) target = $region21
  $region20: #{tpu_custom_call.1} parent=0 // pred_region
    _
  $region21: #{tpu_custom_call.1} parent=0 // pred_fallthru
    _
  // Predicated region
  $region22: #{tpu_custom_call.1} parent=0 // pred_check
    _
  $region23: #{tpu_custom_call.1} parent=0 // pred_check_branch
    %521 = sbr.rel (0) target = $region25
  $region24: #{tpu_custom_call.1} parent=0 // pred_region
    _
  $region25: #{tpu_custom_call.1} parent=0 // pred_fallthru
    _
  // Predicated region
  $region26: #{tpu_custom_call.1} parent=0 // pred_check
    _
  $region27: #{tpu_custom_call.1} parent=0 // pred_check_branch
    %523 = sbr.rel (0) target = $region29
  $region28: #{tpu_custom_call.1} parent=0 // pred_region
    _
  $region29: #{tpu_custom_call.1} parent=0 // pred_fallthru
    _

</llo_original>
